<compile_context>
chip_gen: v7x
topology: tpu7x:2x2x1
jax: 0.10.0
libtpu: 0.0.40
codegen_flags: <defaults>
</compile_context>

<pallas_src>
import jax
import jax.numpy as jnp
from jax.experimental import pallas as pl
from jax.experimental.pallas import tpu as pltpu

ALPHA = 0.47
BETA = 0.5
GAMMA = 0.09

LANE = 128
_SUBLANE = {4: 8, 2: 16, 1: 32}        # sublane multiple per itemsize
_PALLAS_MIN_BYTES = 256 * 1024          # below this, plain jnp (XLA fuses it)


def _polynome_kernel(x_ref, o_ref):
    # Upcast to f32 so low-precision inputs still evaluate Horner at full
    # precision (free: VPU has plenty of slack, kernel is HBM-bound).
    x = x_ref[...].astype(jnp.float32)
    o_ref[...] = ((GAMMA * x + BETA) * x + ALPHA).astype(o_ref.dtype)


def _polynome_jnp(x):
    x32 = x.astype(jnp.float32)
    return ((GAMMA * x32 + BETA) * x32 + ALPHA).astype(x.dtype)


def _round_up(v, m):
    return ((v + m - 1) // m) * m


def _device_block_policy():
    """(target_block_bytes, vmem_limit_bytes_or_None, min_grid_steps)."""
    try:
        kind = jax.devices()[0].device_kind.lower()
    except Exception:  # pragma: no cover - defensive only
        kind = ""
    if "v7" in kind:
        # 64 MiB physical VMEM; 8 MiB blocks x (in+out) x 2 buffers = 32 MiB.
        return 8 << 20, 48 << 20, 2
    if "v5" in kind:
        # 16 MiB scoped default; 2 MiB blocks x 4 buffers = 8 MiB.
        return 2 << 20, None, 1
    # v6e / default: 32 MiB scoped default; 4 MiB blocks x 4 buffers = 16 MiB.
    return 4 << 20, None, 1


def _select_row_tile(rows, itemsize):
    block_bytes, vmem_limit, min_steps = _device_block_policy()
    sub = _SUBLANE.get(itemsize, 8)
    row_bytes = LANE * itemsize
    max_tile = max(sub, (block_bytes // row_bytes) // sub * sub)
    total_bytes = rows * row_bytes

    if rows <= max_tile:
        row_tile = rows            # single full-extent block (no (8,128) issue)
        steps = 1
    else:
        row_tile = max_tile        # multiple of sub; ragged tail -> masked stores
        steps = pl.cdiv(rows, row_tile)

    # v7x: never run a 1-step grid for >1 MiB inputs (both TCs must stream),
    # and keep small grids even so neither core gets a whole extra block.
    if min_steps >= 2 and total_bytes > (1 << 20):
        steps = max(steps, min_steps)
        if 2 <= steps <= 8 and steps % 2 == 1:
            steps += 1
        row_tile = min(rows, _round_up(pl.cdiv(rows, steps), sub))

    return row_tile, vmem_limit


def polynome_act(x: jax.Array, *, force_pallas: bool = False) -> jax.Array:
    """Elementwise polynomial activation, matching Polynome_ACT.forward."""
    orig_shape = x.shape
    orig_dtype = x.dtype
    n = x.size

    if n == 0:
        return x

    # Small-input fast path: XLA fuses the pure-elementwise expression for free.
    if not force_pallas and n * x.dtype.itemsize < _PALLAS_MIN_BYTES:
        return _polynome_jnp(x)

    flat = x.reshape(-1)
    rows = n // LANE
    rem = n - rows * LANE

    if rows == 0:
        # Fewer than 128 elements total: nothing worth a kernel launch.
        return _polynome_jnp(x)

    # 128-aligned prefix goes through the Pallas kernel (copy-free reshape);
    # the <=127-element tail (if any) is computed with jnp and concatenated —
    # avoids the pad + post-slice extra HBM passes entirely.
    slab = flat[: rows * LANE].reshape(rows, LANE)

    itemsize = jnp.dtype(orig_dtype).itemsize
    row_tile, vmem_limit = _select_row_tile(rows, itemsize)
    grid = (pl.cdiv(rows, row_tile),)   # ragged last block -> masked stores

    cp_kwargs = dict(dimension_semantics=("parallel",))  # shard grid across TCs
    if vmem_limit is not None:
        cp_kwargs["vmem_limit_bytes"] = vmem_limit

    main_bytes = rows * LANE * itemsize
    out = pl.pallas_call(
        _polynome_kernel,
        out_shape=jax.ShapeDtypeStruct((rows, LANE), orig_dtype),
        grid_spec=pltpu.PrefetchScalarGridSpec(
            num_scalar_prefetch=0,
            grid=grid,
            in_specs=[pl.BlockSpec((row_tile, LANE), lambda i: (i, 0))],
            out_specs=pl.BlockSpec((row_tile, LANE), lambda i: (i, 0)),
        ),
        compiler_params=pltpu.CompilerParams(**cp_kwargs),
        cost_estimate=pl.CostEstimate(
            flops=4 * rows * LANE,           # Horner: 2 mul + 2 add per element
            transcendentals=0,
            bytes_accessed=2 * main_bytes,   # one read + one write stream
        ),
    )(slab)

    out_flat = out.reshape(-1)
    if rem:
        tail_out = _polynome_jnp(flat[rows * LANE:])
        out_flat = jnp.concatenate([out_flat, tail_out])
    return out_flat.reshape(orig_shape)


if __name__ == "__main__":
    key = jax.random.PRNGKey(0)

    # NCHW input, small shapes: batch=2, channels=4, spatial=16x16 (n = 2048).
    x = jax.random.normal(key, (2, 4, 16, 16), dtype=jnp.float32)

    # Exercise the Pallas kernel (bypass the tiny-input jnp fast path).
    y = jax.block_until_ready(polynome_act(x, force_pallas=True))
    y_ref = ALPHA + BETA * x + GAMMA * x**2
    assert y.shape == x.shape and y.dtype == x.dtype
    assert jnp.allclose(y, y_ref, atol=1e-6, rtol=1e-6)

    # Non-128-divisible size exercises the aligned-prefix + jnp-tail path.
    x2 = jax.random.normal(jax.random.PRNGKey(1), (3, 5, 7, 11), dtype=jnp.float32)
    y2 = jax.block_until_ready(polynome_act(x2, force_pallas=True))
    y2_ref = ALPHA + BETA * x2 + GAMMA * x2**2
    assert y2.shape == x2.shape and y2.dtype == x2.dtype
    assert jnp.allclose(y2, y2_ref, atol=1e-6, rtol=1e-6)

    # Sanity-check the default (fast-path) wrapper behavior as well.
    y_fast = jax.block_until_ready(polynome_act(x))
    assert jnp.allclose(y_fast, y_ref, atol=1e-6, rtol=1e-6)

    print("KERNEL_OK")
</pallas_src>

<mosaic_0001>
module attributes {stable_mosaic.version = 11 : i64} {
  func.func @_polynome_kernel(%arg0: i32, %arg1: memref<16x128xf32, #tpu.memory_space<vmem>>, %arg2: memref<16x128xf32, #tpu.memory_space<vmem>>) attributes {dimension_semantics = [#tpu.dimension_semantics<parallel>], iteration_bounds = array<i64: 1>, scalar_prefetch = 0 : i64, scratch_operands = 0 : i64, tpu.core_type = #tpu.core_type<tc>, window_params = [{transform_indices = @transform_0, window_bounds = array<i64: 16, 128>}, {transform_indices = @transform_1, window_bounds = array<i64: 16, 128>}]} {
    %c0 = arith.constant 0 : index
    %c0_0 = arith.constant 0 : index
    %0 = vector.load %arg1[%c0, %c0_0] : memref<16x128xf32, #tpu.memory_space<vmem>>, vector<16x128xf32>
    %cst = arith.constant 9.000000e-02 : f32
    %1 = vector.broadcast %cst : f32 to vector<16x128xf32>
    %2 = arith.mulf %1, %0 : vector<16x128xf32>
    %cst_1 = arith.constant 5.000000e-01 : f32
    %3 = vector.broadcast %cst_1 : f32 to vector<16x128xf32>
    %4 = arith.addf %2, %3 : vector<16x128xf32>
    %5 = arith.mulf %4, %0 : vector<16x128xf32>
    %cst_2 = arith.constant 4.700000e-01 : f32
    %6 = vector.broadcast %cst_2 : f32 to vector<16x128xf32>
    %7 = arith.addf %5, %6 : vector<16x128xf32>
    %c0_3 = arith.constant 0 : index
    %c0_4 = arith.constant 0 : index
    %8 = vector.load %arg2[%c0_3, %c0_4] : memref<16x128xf32, #tpu.memory_space<vmem>>, vector<16x128xf32>
    tpu.vector_store %arg2[%c0_3, %c0_4], %7 {strides = array<i32>} : memref<16x128xf32, #tpu.memory_space<vmem>>, vector<16x128xf32>,
    return
  }
  func.func @transform_0(%arg0: i32) -> (i32, i32) {
    %c0_i32 = arith.constant 0 : i32
    %c0_i32_0 = arith.constant 0 : i32
    return %arg0, %c0_i32 : i32, i32
  }
  func.func @transform_1(%arg0: i32) -> (i32, i32) {
    %c0_i32 = arith.constant 0 : i32
    %c0_i32_0 = arith.constant 0 : i32
    return %arg0, %c0_i32 : i32, i32
  }
}

</mosaic_0001>

<llo_original>
// kernel: tpu_custom_call.1
$region0: #{tpu_custom_call.1}
  #allocation0 [shape = 'u32[]', space=smem, size = 0x4, offset = 0x4, fixed_abs, tag = 'smem constant byte address 0x4 - core index']
  #allocation1 [shape = 'u32[144,128]{1,0:T(1,128)}', space=vmem, size = 0x12000, scoped, tag = 'internal scratch']
  %s0 = inlined_call_operand.hbm [shape: f32[16,128], index: 0, kind: input, shape index: {}]
  %s1 = inlined_call_operand.hbm [shape: f32[16,128], index: 1, kind: output, shape index: {}]
  %s2 = sld [smem:[#allocation0]]
  $region18: #{tpu_custom_call.1} parent=0
    _
  %s4 = ssub.s32 1, %s2
  %s5 = scalar_select 0, %s4, %s2
  $region1: #{tpu_custom_call.1} parent=0
    #allocation2 [shape = 'u8[8192]{0}', space=vmem, size = 0x2000, scoped, tag = 'input window, operand 0, single buffered']
    #allocation3 [shape = 's32[1]{0}', space=sflag, size = 0x4, scoped, tag = 'scoped memory for tpu_custom_call.1']
    #allocation4 [shape = 's32[1]{0}', space=sflag, size = 0x4, scoped, tag = 'scoped memory for tpu_custom_call.1']
    #allocation5 [shape = 'u8[8192]{0}', space=vmem, size = 0x2000, scoped, tag = 'output window, operand 0, single buffered']
    %6 = vsyncpa [#allocation3], 0
    %7 = vsyncpa [#allocation4], 0
    // Predicated region
    $region2: #{tpu_custom_call.1} parent=1 // pred_check
      _
    $region3: #{tpu_custom_call.1} parent=1 // pred_check_branch
      %9 = sbr.rel (0) target = $region5
    $region4: #{tpu_custom_call.1} parent=1 // pred_region
      %s11 = ssub.s32 256, 256
      %12 = vsyncadd [#allocation3], %s11
      %s13 = sshll.u32 [#allocation2], 4
      %s14 = int_to_ptr.vmem [resolvable:$true] %s13
      %19 = dma.hbm_to_vmem [thread:$0]  %s0, 256, %s14, [#allocation3], 128, 128, 8
    $region5: #{tpu_custom_call.1} parent=1 // pred_fallthru
      _
    // Predicated region
    $region6: #{tpu_custom_call.1} parent=1 // pred_check
      _
    $region7: #{tpu_custom_call.1} parent=1 // pred_check_branch
      %21 = sbr.rel (0) target = $region9
    $region8: #{tpu_custom_call.1} parent=1 // pred_region
      %22 = dma.done [#allocation3], 256
    $region9: #{tpu_custom_call.1} parent=1 // pred_fallthru
      _
    %v23 = vld [vmem:[#allocation2] sm:$0xff]
    %v24 = vld [vmem:[#allocation2 + $0x8] sm:$0xff]
    %v25 = vmul.f32 %v23, 0.09
    %v26 = vmul.f32 %v24, 0.09
    %v27 = vadd.f32 %v25, 0.5
    %v28 = vadd.f32 %v26, 0.5
    %v29 = vmul.f32 %v27, %v23
    %v30 = vmul.f32 %v28, %v24
    %v31 = vadd.f32 %v29, 0.47
    %v32 = vadd.f32 %v30, 0.47
    %33 = vst [vmem:[#allocation5] sm:$0xff] %v31
    %34 = vst [vmem:[#allocation5 + $0x8] sm:$0xff] %v32
    // Predicated region
    $region10: #{tpu_custom_call.1} parent=1 // pred_check
      _
    $region11: #{tpu_custom_call.1} parent=1 // pred_check_branch
      %36 = sbr.rel (0) target = $region13
    $region12: #{tpu_custom_call.1} parent=1 // pred_region
      %s38 = ssub.s32 256, 256
      %39 = vsyncadd [#allocation4], %s38
      %s40 = sshll.u32 [#allocation5], 4
      %s41 = int_to_ptr.vmem [resolvable:$true] %s40
      %46 = dma.vmem_to_hbm [thread:$0]  %s41, 256, %s1, [#allocation4], 128, 128, 8
    $region13: #{tpu_custom_call.1} parent=1 // pred_fallthru
      _
    // Predicated region
    $region14: #{tpu_custom_call.1} parent=1 // pred_check
      _
    $region15: #{tpu_custom_call.1} parent=1 // pred_check_branch
      %48 = sbr.rel (0) target = $region17
    $region16: #{tpu_custom_call.1} parent=1 // pred_region
      %49 = dma.done [#allocation4], 256
    $region17: #{tpu_custom_call.1} parent=1 // pred_fallthru
      _
    %50 = vsyncpa [#allocation3], 1
    %51 = vsyncpa [#allocation4], 1

</llo_original>
